<compile_context>
chip_gen: v5e
topology: v5e:2x2
jax: 0.10.0
libtpu: 0.0.40
codegen_flags: <defaults>
</compile_context>

<pallas_src>
import jax
import jax.numpy as jnp
from jax.experimental import pallas as pl
from jax.experimental.pallas import tpu as pltpu


def _act(v):
    # GELU (tanh approx) -- EUP-friendly on TPU.
    return jax.nn.gelu(v, approximate=True)


def mixer_kernel(x_ref,
                 w1t_ref, b1_ref,   # to_cols_expand    W1^T (D, D*m),     b1 (1, D*m)
                 w2_ref, b2_ref,    # to_rows_expand    W2   (N*m, N),     b2 (N*m, 1)
                 w3_ref, b3_ref,    # to_rows_contract  W3   (Nout, N*m),  b3 (Nout, 1)
                 w4t_ref, b4_ref,   # to_cols_contract  W4^T (D*m, Dout),  b4 (1, Dout)
                 o_ref):
    bt, n, d = x_ref.shape
    dm = w1t_ref.shape[1]
    nout = o_ref.shape[1]
    dout = o_ref.shape[2]

    # ---- Layer 1 (to_cols_expand): batch folded into M.
    #      (bt, n, d) -> (bt*n, d) is a leading-dim merge (n == 8 == sublane
    #      tile), i.e. a free shape cast.
    xf = x_ref[...].reshape(bt * n, d)
    h1 = jnp.dot(xf, w1t_ref[...], preferred_element_type=jnp.float32) + b1_ref[...]
    a1 = _act(h1)                                                      # (bt*n, dm)

    # ---- Single relayout: (bt, n, dm) -> (n, bt*dm), so layers 2/3 each run as
    #      ONE matmul with the batch folded into the lane axis (bt*dm lanes).
    a1t = a1.reshape(bt, n, dm).transpose(1, 0, 2).reshape(n, bt * dm)

    # ---- Layers 2/3 (to_rows_expand / to_rows_contract), transpose-free:
    #      PyTorch computes act(h1)^T @ W2^T + b2; its transpose is
    #      W2 @ act(h1) + b2[:, None] -- already in 'b n d' orientation, so the
    #      module's second rearrange becomes a no-op.  Biases lane-broadcast
    #      once over the bt*dm axis.
    g2 = jnp.dot(w2_ref[...], a1t, preferred_element_type=jnp.float32) + b2_ref[...]
    a2 = _act(g2)                                                      # (N*m,  bt*dm)
    g3 = jnp.dot(w3_ref[...], a2, preferred_element_type=jnp.float32) + b3_ref[...]
    a3 = _act(g3)                                                      # (Nout, bt*dm)

    # ---- Fold back to batch-major rows for layer 4 (contraction is over dm,
    #      which cannot stay folded into the lane axis).
    a3b = a3.reshape(nout, bt, dm).transpose(1, 0, 2).reshape(bt * nout, dm)

    # ---- Layer 4 (to_cols_contract): batch folded into M again.
    out = jnp.dot(a3b, w4t_ref[...], preferred_element_type=jnp.float32) + b4_ref[...]
    # dout == 16 lanes -> masked stores; an in-kernel repack to 128 lanes would
    # cost a cross-tile relayout of comparable size, so store directly.
    o_ref[...] = out.reshape(bt, nout, dout).astype(o_ref.dtype)


def _choose_block_b(B, n, d, dm, nm, nout, dout):
    """Default batch block = whole batch (grid of 1 step).

    Only split 2-way (to feed both v7x TensorCores through the 'parallel' grid
    axis) when the per-step matmul work clearly exceeds the ~0.35-1 us per-step
    pipeline overhead.  On single-TC v5e/v6e the split never helps, and at toy
    shapes it is pure overhead everywhere.
    """
    if B % 2 != 0:
        return B
    half = B // 2
    flops_per_step = 2 * half * (n * d * dm + n * nm * dm + nm * nout * dm
                                 + nout * dm * dout)
    # Narrow tiles run far below MXU peak; require >~1 us of work per step
    # (at an already-optimistic ~20 TF/s effective rate) before splitting.
    return half if flops_per_step > 20_000_000 else B


def mixer_forward(x, params, *, block_b=None):
    """x: (B, N, D); params as produced by init_params (see layout comments)."""
    B, n, d = x.shape
    w1t, b1, w2, b2, w3, b3, w4t, b4 = params
    dm = w1t.shape[1]
    nm = w2.shape[0]
    out_rows = w3.shape[0]
    out_cols = w4t.shape[1]

    if block_b is None:
        block_b = _choose_block_b(B, n, d, dm, nm, out_rows, out_cols)
    assert B % block_b == 0, "batch must be divisible by block_b"

    def const_spec(a):
        # Full-array block, same block every grid step (weights/biases are 2-D).
        # TODO(synk): mark single-buffered (pipeline_mode=pl.Buffered(1)) and set
        # vmem_limit_bytes once D*multiplier scales toward the scoped-VMEM limit.
        return pl.BlockSpec(a.shape, lambda i: (0, 0))

    return pl.pallas_call(
        mixer_kernel,
        out_shape=jax.ShapeDtypeStruct((B, out_rows, out_cols), x.dtype),
        grid_spec=pltpu.PrefetchScalarGridSpec(
            num_scalar_prefetch=0,
            grid=(B // block_b,),
            in_specs=[pl.BlockSpec((block_b, n, d), lambda i: (i, 0, 0))]
                     + [const_spec(a) for a in params],
            out_specs=pl.BlockSpec((block_b, out_rows, out_cols),
                                   lambda i: (i, 0, 0)),
        ),
        compiler_params=pltpu.CompilerParams(
            dimension_semantics=("parallel",)),
    )(x, *params)


def mixer_ref(x, params):
    """Pure-JAX reference that literally follows the PyTorch forward (with the
    two rearranges), so it independently validates the transpose-free kernel."""
    w1t, b1, w2, b2, w3, b3, w4t, b4 = params
    h = x @ w1t + b1                   # (B, N, D*m)    to_cols_expand
    h = jnp.swapaxes(h, 1, 2)          # (B, D*m, N)    'b n d -> b d n'
    h = _act(h)
    h = h @ w2.T + b2[:, 0]            # (B, D*m, N*m)  to_rows_expand
    h = _act(h)
    h = h @ w3.T + b3[:, 0]            # (B, D*m, Nout) to_rows_contract
    h = jnp.swapaxes(h, 1, 2)          # (B, Nout, D*m) 'b d n -> b n d'
    h = _act(h)
    return h @ w4t + b4                # (B, Nout, Dout) to_cols_contract


def init_params(key, in_rows, out_rows, in_cols, out_cols, multiplier):
    """Deterministic nn.Linear-style params.

    Kernel layout:
      to_cols_expand   : W1^T (D,   D*m),    b1 (1,    D*m)
      to_rows_expand   : W2   (N*m, N),      b2 (N*m,  1)
      to_rows_contract : W3   (Nout,N*m),    b3 (Nout, 1)
      to_cols_contract : W4^T (D*m, Dout),   b4 (1,    Dout)
    """
    n, d, m = in_rows, in_cols, multiplier
    dims = [
        (d, d * m),          # to_cols_expand
        (n, n * m),          # to_rows_expand
        (n * m, out_rows),   # to_rows_contract
        (d * m, out_cols),   # to_cols_contract
    ]
    keys = jax.random.split(key, len(dims) * 2)
    ws, bs = [], []
    for i, (fan_in, fan_out) in enumerate(dims):
        bound = 1.0 / (fan_in ** 0.5)
        w = jax.random.uniform(keys[2 * i], (fan_out, fan_in),
                               minval=-bound, maxval=bound, dtype=jnp.float32)
        b = jax.random.uniform(keys[2 * i + 1], (fan_out,),
                               minval=-bound, maxval=bound, dtype=jnp.float32)
        ws.append(w)
        bs.append(b)
    w1, w2, w3, w4 = ws
    b1, b2, b3, b4 = bs
    return (w1.T, b1[None, :],     # (D, D*m),    (1, D*m)
            w2, b2[:, None],       # (N*m, N),    (N*m, 1)
            w3, b3[:, None],       # (Nout, N*m), (Nout, 1)
            w4.T, b4[None, :])     # (D*m, Dout), (1, Dout)


if __name__ == "__main__":
    # Small shapes consistent with the module: in_rows(n)=8, in_cols(d)=16.
    # With B=8 the size heuristic keeps the whole batch in one grid step.
    B, in_rows, in_cols = 8, 8, 16
    multiplier = 4
    out_rows, out_cols = in_rows, in_cols   # out_cols defaults to in_cols

    key = jax.random.PRNGKey(0)
    kx, kp = jax.random.split(key)
    x = jax.random.normal(kx, (B, in_rows, in_cols), dtype=jnp.float32)
    params = init_params(kp, in_rows, out_rows, in_cols, out_cols, multiplier)

    out = mixer_forward(x, params)
    out = jax.block_until_ready(out)

    ref = mixer_ref(x, params)
    assert out.shape == (B, out_rows, out_cols)
    assert jnp.allclose(out, ref, atol=1e-5, rtol=1e-5), "mismatch vs JAX reference"

    print("KERNEL_OK")
</pallas_src>

<mosaic_0001>
module attributes {stable_mosaic.version = 11 : i64} {
  func.func @mixer_kernel(%arg0: i32, %arg1: memref<8x8x16xf32, #tpu.memory_space<vmem>>, %arg2: memref<16x64xf32, #tpu.memory_space<vmem>>, %arg3: memref<1x64xf32, #tpu.memory_space<vmem>>, %arg4: memref<32x8xf32, #tpu.memory_space<vmem>>, %arg5: memref<32x1xf32, #tpu.memory_space<vmem>>, %arg6: memref<8x32xf32, #tpu.memory_space<vmem>>, %arg7: memref<8x1xf32, #tpu.memory_space<vmem>>, %arg8: memref<64x16xf32, #tpu.memory_space<vmem>>, %arg9: memref<1x16xf32, #tpu.memory_space<vmem>>, %arg10: memref<8x8x16xf32, #tpu.memory_space<vmem>>) attributes {dimension_semantics = [#tpu.dimension_semantics<parallel>], iteration_bounds = array<i64: 1>, scalar_prefetch = 0 : i64, scratch_operands = 0 : i64, tpu.core_type = #tpu.core_type<tc>, window_params = [{transform_indices = @transform_0, window_bounds = array<i64: 8, 8, 16>}, {pipeline_mode = #tpu.pipeline_mode<synchronous>, transform_indices = @transform_1, window_bounds = array<i64: 16, 64>}, {pipeline_mode = #tpu.pipeline_mode<synchronous>, transform_indices = @transform_2, window_bounds = array<i64: 1, 64>}, {pipeline_mode = #tpu.pipeline_mode<synchronous>, transform_indices = @transform_3, window_bounds = array<i64: 32, 8>}, {pipeline_mode = #tpu.pipeline_mode<synchronous>, transform_indices = @transform_4, window_bounds = array<i64: 32, 1>}, {pipeline_mode = #tpu.pipeline_mode<synchronous>, transform_indices = @transform_5, window_bounds = array<i64: 8, 32>}, {pipeline_mode = #tpu.pipeline_mode<synchronous>, transform_indices = @transform_6, window_bounds = array<i64: 8, 1>}, {pipeline_mode = #tpu.pipeline_mode<synchronous>, transform_indices = @transform_7, window_bounds = array<i64: 64, 16>}, {pipeline_mode = #tpu.pipeline_mode<synchronous>, transform_indices = @transform_8, window_bounds = array<i64: 1, 16>}, {transform_indices = @transform_9, window_bounds = array<i64: 8, 8, 16>}]} {
    %c0 = arith.constant 0 : index
    %c0_0 = arith.constant 0 : index
    %c0_1 = arith.constant 0 : index
    %0 = vector.load %arg1[%c0, %c0_0, %c0_1] : memref<8x8x16xf32, #tpu.memory_space<vmem>>, vector<8x8x16xf32>
    %1 = vector.shape_cast %0 : vector<8x8x16xf32> to vector<64x16xf32>
    %c0_2 = arith.constant 0 : index
    %c0_3 = arith.constant 0 : index
    %2 = vector.load %arg2[%c0_2, %c0_3] : memref<16x64xf32, #tpu.memory_space<vmem>>, vector<16x64xf32>
    %cst = arith.constant dense<0.000000e+00> : vector<64x64xf32>
    %3 = tpu.matmul %1, %2, %cst {dimension_numbers = #tpu.dot_dimension_numbers<[1], [0], [0], [1], [0, 0, 1, 1], [], []>} : vector<64x16xf32>, vector<16x64xf32>, vector<64x64xf32> -> vector<64x64xf32>
    %c0_4 = arith.constant 0 : index
    %c0_5 = arith.constant 0 : index
    %4 = vector.load %arg3[%c0_4, %c0_5] : memref<1x64xf32, #tpu.memory_space<vmem>>, vector<1x64xf32>
    %5 = vector.broadcast %4 : vector<1x64xf32> to vector<64x64xf32>
    %6 = arith.addf %3, %5 : vector<64x64xf32>
    %7 = arith.mulf %6, %6 : vector<64x64xf32>
    %8 = arith.mulf %6, %7 : vector<64x64xf32>
    %cst_6 = arith.constant 4.471500e-02 : f32
    %9 = vector.broadcast %cst_6 : f32 to vector<64x64xf32>
    %10 = arith.mulf %9, %8 : vector<64x64xf32>
    %11 = arith.addf %6, %10 : vector<64x64xf32>
    %cst_7 = arith.constant 0.797884583 : f32
    %12 = vector.broadcast %cst_7 : f32 to vector<64x64xf32>
    %13 = arith.mulf %12, %11 : vector<64x64xf32>
    %14 = math.tanh %13 : vector<64x64xf32>
    %cst_8 = arith.constant 1.000000e+00 : f32
    %15 = vector.broadcast %cst_8 : f32 to vector<64x64xf32>
    %16 = arith.addf %15, %14 : vector<64x64xf32>
    %cst_9 = arith.constant 5.000000e-01 : f32
    %17 = vector.broadcast %cst_9 : f32 to vector<64x64xf32>
    %18 = arith.mulf %17, %16 : vector<64x64xf32>
    %19 = arith.mulf %6, %18 : vector<64x64xf32>
    %20 = vector.shape_cast %19 : vector<64x64xf32> to vector<8x8x64xf32>
    %21 = tpu.transpose %20, [1, 0, 2] : vector<8x8x64xf32> -> vector<8x8x64xf32>
    %22 = vector.shape_cast %21 : vector<8x8x64xf32> to vector<8x512xf32>
    %c0_10 = arith.constant 0 : index
    %c0_11 = arith.constant 0 : index
    %23 = vector.load %arg4[%c0_10, %c0_11] : memref<32x8xf32, #tpu.memory_space<vmem>>, vector<32x8xf32>
    %cst_12 = arith.constant dense<0.000000e+00> : vector<32x512xf32>
    %24 = tpu.matmul %23, %22, %cst_12 {dimension_numbers = #tpu.dot_dimension_numbers<[1], [0], [0], [1], [0, 0, 1, 1], [], []>} : vector<32x8xf32>, vector<8x512xf32>, vector<32x512xf32> -> vector<32x512xf32>
    %c0_13 = arith.constant 0 : index
    %c0_14 = arith.constant 0 : index
    %25 = vector.load %arg5[%c0_13, %c0_14] : memref<32x1xf32, #tpu.memory_space<vmem>>, vector<32x1xf32>
    %26 = vector.broadcast %25 : vector<32x1xf32> to vector<32x512xf32>
    %27 = arith.addf %24, %26 : vector<32x512xf32>
    %28 = arith.mulf %27, %27 : vector<32x512xf32>
    %29 = arith.mulf %27, %28 : vector<32x512xf32>
    %cst_15 = arith.constant 4.471500e-02 : f32
    %30 = vector.broadcast %cst_15 : f32 to vector<32x512xf32>
    %31 = arith.mulf %30, %29 : vector<32x512xf32>
    %32 = arith.addf %27, %31 : vector<32x512xf32>
    %cst_16 = arith.constant 0.797884583 : f32
    %33 = vector.broadcast %cst_16 : f32 to vector<32x512xf32>
    %34 = arith.mulf %33, %32 : vector<32x512xf32>
    %35 = math.tanh %34 : vector<32x512xf32>
    %cst_17 = arith.constant 1.000000e+00 : f32
    %36 = vector.broadcast %cst_17 : f32 to vector<32x512xf32>
    %37 = arith.addf %36, %35 : vector<32x512xf32>
    %cst_18 = arith.constant 5.000000e-01 : f32
    %38 = vector.broadcast %cst_18 : f32 to vector<32x512xf32>
    %39 = arith.mulf %38, %37 : vector<32x512xf32>
    %40 = arith.mulf %27, %39 : vector<32x512xf32>
    %c0_19 = arith.constant 0 : index
    %c0_20 = arith.constant 0 : index
    %41 = vector.load %arg6[%c0_19, %c0_20] : memref<8x32xf32, #tpu.memory_space<vmem>>, vector<8x32xf32>
    %cst_21 = arith.constant dense<0.000000e+00> : vector<8x512xf32>
    %42 = tpu.matmul %41, %40, %cst_21 {dimension_numbers = #tpu.dot_dimension_numbers<[1], [0], [0], [1], [0, 0, 1, 1], [], []>} : vector<8x32xf32>, vector<32x512xf32>, vector<8x512xf32> -> vector<8x512xf32>
    %c0_22 = arith.constant 0 : index
    %c0_23 = arith.constant 0 : index
    %43 = vector.load %arg7[%c0_22, %c0_23] : memref<8x1xf32, #tpu.memory_space<vmem>>, vector<8x1xf32>
    %44 = vector.broadcast %43 : vector<8x1xf32> to vector<8x512xf32>
    %45 = arith.addf %42, %44 : vector<8x512xf32>
    %46 = arith.mulf %45, %45 : vector<8x512xf32>
    %47 = arith.mulf %45, %46 : vector<8x512xf32>
    %cst_24 = arith.constant 4.471500e-02 : f32
    %48 = vector.broadcast %cst_24 : f32 to vector<8x512xf32>
    %49 = arith.mulf %48, %47 : vector<8x512xf32>
    %50 = arith.addf %45, %49 : vector<8x512xf32>
    %cst_25 = arith.constant 0.797884583 : f32
    %51 = vector.broadcast %cst_25 : f32 to vector<8x512xf32>
    %52 = arith.mulf %51, %50 : vector<8x512xf32>
    %53 = math.tanh %52 : vector<8x512xf32>
    %cst_26 = arith.constant 1.000000e+00 : f32
    %54 = vector.broadcast %cst_26 : f32 to vector<8x512xf32>
    %55 = arith.addf %54, %53 : vector<8x512xf32>
    %cst_27 = arith.constant 5.000000e-01 : f32
    %56 = vector.broadcast %cst_27 : f32 to vector<8x512xf32>
    %57 = arith.mulf %56, %55 : vector<8x512xf32>
    %58 = arith.mulf %45, %57 : vector<8x512xf32>
    %59 = vector.shape_cast %58 : vector<8x512xf32> to vector<8x8x64xf32>
    %60 = tpu.transpose %59, [1, 0, 2] : vector<8x8x64xf32> -> vector<8x8x64xf32>
    %61 = vector.shape_cast %60 : vector<8x8x64xf32> to vector<64x64xf32>
    %c0_28 = arith.constant 0 : index
    %c0_29 = arith.constant 0 : index
    %62 = vector.load %arg8[%c0_28, %c0_29] : memref<64x16xf32, #tpu.memory_space<vmem>>, vector<64x16xf32>
    %cst_30 = arith.constant dense<0.000000e+00> : vector<64x16xf32>
    %63 = tpu.matmul %61, %62, %cst_30 {dimension_numbers = #tpu.dot_dimension_numbers<[1], [0], [0], [1], [0, 0, 1, 1], [], []>} : vector<64x64xf32>, vector<64x16xf32>, vector<64x16xf32> -> vector<64x16xf32>
    %c0_31 = arith.constant 0 : index
    %c0_32 = arith.constant 0 : index
    %64 = vector.load %arg9[%c0_31, %c0_32] : memref<1x16xf32, #tpu.memory_space<vmem>>, vector<1x16xf32>
    %65 = vector.broadcast %64 : vector<1x16xf32> to vector<64x16xf32>
    %66 = arith.addf %63, %65 : vector<64x16xf32>
    %67 = vector.shape_cast %66 : vector<64x16xf32> to vector<8x8x16xf32>
    %c0_33 = arith.constant 0 : index
    %c0_34 = arith.constant 0 : index
    %c0_35 = arith.constant 0 : index
    %68 = vector.load %arg10[%c0_33, %c0_34, %c0_35] : memref<8x8x16xf32, #tpu.memory_space<vmem>>, vector<8x8x16xf32>
    tpu.vector_store %arg10[%c0_33, %c0_34, %c0_35], %67 {strides = array<i32>} : memref<8x8x16xf32, #tpu.memory_space<vmem>>, vector<8x8x16xf32>,
    return
  }
  func.func @transform_0(%arg0: i32) -> (i32, i32, i32) {
    %c0_i32 = arith.constant 0 : i32
    %c0_i32_0 = arith.constant 0 : i32
    %c0_i32_1 = arith.constant 0 : i32
    return %arg0, %c0_i32, %c0_i32_0 : i32, i32, i32
  }
  func.func @transform_1(%arg0: i32) -> (i32, i32) {
    %c0_i32 = arith.constant 0 : i32
    %c0_i32_0 = arith.constant 0 : i32
    %c0_i32_1 = arith.constant 0 : i32
    return %c0_i32, %c0_i32_0 : i32, i32
  }
  func.func @transform_2(%arg0: i32) -> (i32, i32) {
    %c0_i32 = arith.constant 0 : i32
    %c0_i32_0 = arith.constant 0 : i32
    %c0_i32_1 = arith.constant 0 : i32
    return %c0_i32, %c0_i32_0 : i32, i32
  }
  func.func @transform_3(%arg0: i32) -> (i32, i32) {
    %c0_i32 = arith.constant 0 : i32
    %c0_i32_0 = arith.constant 0 : i32
    %c0_i32_1 = arith.constant 0 : i32
    return %c0_i32, %c0_i32_0 : i32, i32
  }
  func.func @transform_4(%arg0: i32) -> (i32, i32) {
    %c0_i32 = arith.constant 0 : i32
    %c0_i32_0 = arith.constant 0 : i32
    %c0_i32_1 = arith.constant 0 : i32
    return %c0_i32, %c0_i32_0 : i32, i32
  }
  func.func @transform_5(%arg0: i32) -> (i32, i32) {
    %c0_i32 = arith.constant 0 : i32
    %c0_i32_0 = arith.constant 0 : i32
    %c0_i32_1 = arith.constant 0 : i32
    return %c0_i32, %c0_i32_0 : i32, i32
  }
  func.func @transform_6(%arg0: i32) -> (i32, i32) {
    %c0_i32 = arith.constant 0 : i32
    %c0_i32_0 = arith.constant 0 : i32
    %c0_i32_1 = arith.constant 0 : i32
    return %c0_i32, %c0_i32_0 : i32, i32
  }
  func.func @transform_7(%arg0: i32) -> (i32, i32) {
    %c0_i32 = arith.constant 0 : i32
    %c0_i32_0 = arith.constant 0 : i32
    %c0_i32_1 = arith.constant 0 : i32
    return %c0_i32, %c0_i32_0 : i32, i32
  }
  func.func @transform_8(%arg0: i32) -> (i32, i32) {
    %c0_i32 = arith.constant 0 : i32
    %c0_i32_0 = arith.constant 0 : i32
    %c0_i32_1 = arith.constant 0 : i32
    return %c0_i32, %c0_i32_0 : i32, i32
  }
  func.func @transform_9(%arg0: i32) -> (i32, i32, i32) {
    %c0_i32 = arith.constant 0 : i32
    %c0_i32_0 = arith.constant 0 : i32
    %c0_i32_1 = arith.constant 0 : i32
    return %arg0, %c0_i32, %c0_i32_0 : i32, i32, i32
  }
}

</mosaic_0001>

<llo_original>
// kernel: tpu_custom_call.1
$region0: #{tpu_custom_call.1}
  #allocation0 [shape = 'u32[]', space=smem, size = 0x4, offset = 0x4, fixed_abs, tag = 'smem constant byte address 0x4 - core index']
  #allocation1 [shape = 'u32[72,128]{1,0:T(1,128)}', space=vmem, size = 0x9000, scoped, tag = 'internal scratch']
  %s0 = inlined_call_operand.vmem [shape: f32[8,8,16], index: 0, kind: input, shape index: {}]
  %s1 = inlined_call_operand.vmem [shape: f32[16,64], index: 1, kind: input, shape index: {}]
  %s2 = inlined_call_operand.vmem [shape: f32[1,64], index: 2, kind: input, shape index: {}]
  %s3 = inlined_call_operand.vmem [shape: f32[32,8], index: 3, kind: input, shape index: {}]
  %s4 = inlined_call_operand.vmem [shape: f32[32,1], index: 4, kind: input, shape index: {}]
  %s5 = inlined_call_operand.vmem [shape: f32[8,32], index: 5, kind: input, shape index: {}]
  %s6 = inlined_call_operand.vmem [shape: f32[8,1], index: 6, kind: input, shape index: {}]
  %s7 = inlined_call_operand.vmem [shape: f32[64,16], index: 7, kind: input, shape index: {}]
  %s8 = inlined_call_operand.vmem [shape: f32[1,16], index: 8, kind: input, shape index: {}]
  %s9 = inlined_call_operand.hbm [shape: f32[8,8,16], index: 9, kind: output, shape index: {}]
  %s10 = sld [smem:[#allocation0]]
  $region46: #{tpu_custom_call.1} parent=0
    _
  %s12 = ssub.s32 1, %s10
  %s13 = scalar_select 0, %s12, %s10
  $region1: #{tpu_custom_call.1} parent=0
    #allocation2 [shape = 'u8[32768]{0}', space=vmem, size = 0x8000, scoped, tag = 'output window, operand 0, single buffered']
    #allocation3 [shape = 's32[1]{0}', space=sflag, size = 0x4, scoped, tag = 'scoped memory for tpu_custom_call.1']
    %14 = vsyncpa [#allocation3], 0
    // Predicated region
    $region2: #{tpu_custom_call.1} parent=1 // pred_check
      _
    $region3: #{tpu_custom_call.1} parent=1 // pred_check_branch
      %16 = sbr.rel (0) target = $region5
    $region4: #{tpu_custom_call.1} parent=1 // pred_region
      _
    $region5: #{tpu_custom_call.1} parent=1 // pred_fallthru
      _
    // Predicated region
    $region6: #{tpu_custom_call.1} parent=1 // pred_check
      _
    $region7: #{tpu_custom_call.1} parent=1 // pred_check_branch
      %18 = sbr.rel (0) target = $region9
    $region8: #{tpu_custom_call.1} parent=1 // pred_region
      _
    $region9: #{tpu_custom_call.1} parent=1 // pred_fallthru
      _
    // Predicated region
    $region10: #{tpu_custom_call.1} parent=1 // pred_check
      _
    $region11: #{tpu_custom_call.1} parent=1 // pred_check_branch
      %20 = sbr.rel (0) target = $region13
    $region12: #{tpu_custom_call.1} parent=1 // pred_region
      _
    $region13: #{tpu_custom_call.1} parent=1 // pred_fallthru
      _
    // Predicated region
    $region14: #{tpu_custom_call.1} parent=1 // pred_check
      _
    $region15: #{tpu_custom_call.1} parent=1 // pred_check_branch
      %22 = sbr.rel (0) target = $region17
    $region16: #{tpu_custom_call.1} parent=1 // pred_region
      _
    $region17: #{tpu_custom_call.1} parent=1 // pred_fallthru
      _
    // Predicated region
    $region18: #{tpu_custom_call.1} parent=1 // pred_check
      _
    $region19: #{tpu_custom_call.1} parent=1 // pred_check_branch
      %24 = sbr.rel (0) target = $region21
    $region20: #{tpu_custom_call.1} parent=1 // pred_region
      _
    $region21: #{tpu_custom_call.1} parent=1 // pred_fallthru
      _
    // Predicated region
    $region22: #{tpu_custom_call.1} parent=1 // pred_check
      _
    $region23: #{tpu_custom_call.1} parent=1 // pred_check_branch
      %26 = sbr.rel (0) target = $region25
    $region24: #{tpu_custom_call.1} parent=1 // pred_region
      _
    $region25: #{tpu_custom_call.1} parent=1 // pred_fallthru
      _
    // Predicated region
    $region26: #{tpu_custom_call.1} parent=1 // pred_check
      _
    $region27: #{tpu_custom_call.1} parent=1 // pred_check_branch
      %28 = sbr.rel (0) target = $region29
    $region28: #{tpu_custom_call.1} parent=1 // pred_region
      _
    $region29: #{tpu_custom_call.1} parent=1 // pred_fallthru
      _
    // Predicated region
    $region30: #{tpu_custom_call.1} parent=1 // pred_check
      _
    $region31: #{tpu_custom_call.1} parent=1 // pred_check_branch
      %30 = sbr.rel (0) target = $region33
    $region32: #{tpu_custom_call.1} parent=1 // pred_region
      _
    $region33: #{tpu_custom_call.1} parent=1 // pred_fallthru
      _
    // Predicated region
    $region34: #{tpu_custom_call.1} parent=1 // pred_check
      _
    $region35: #{tpu_custom_call.1} parent=1 // pred_check_branch
      %32 = sbr.rel (0) target = $region37
    $region36: #{tpu_custom_call.1} parent=1 // pred_region
      _
    $region37: #{tpu_custom_call.1} parent=1 // pred_fallthru
      _
    %v33 = vld [vmem:[%s0] sm:$0xff]
    %v34 = vld [vmem:[%s0 + $0x8] sm:$0xff]
    %v35 = vld [vmem:[%s0 + $0x10] sm:$0xff]
    %v36 = vld [vmem:[%s0 + $0x18] sm:$0xff]
    %v37 = vld [vmem:[%s0 + $0x20] sm:$0xff]
    %v38 = vld [vmem:[%s0 + $0x28] sm:$0xff]
    %v39 = vld [vmem:[%s0 + $0x30] sm:$0xff]
    %v40 = vld [vmem:[%s0 + $0x38] sm:$0xff]
    %v41 = vld [vmem:[%s1] sm:$0xff]
    %v42 = vld [vmem:[%s1 + $0x8] sm:$0xff]
    %v43 = vld [vmem:[%s2] sm:$0x1]
    %v45 = vperm.slane %v43, 0
    %vm47 = vcmask 130048
    %v49 = vsel %vm47, %v33, 0
    %v52 = vsel %vm47, %v34, 0
    %v55 = vsel %vm47, %v35, 0
    %v58 = vsel %vm47, %v36, 0
    %v61 = vsel %vm47, %v37, 0
    %v64 = vsel %vm47, %v38, 0
    %v67 = vsel %vm47, %v39, 0
    %v70 = vsel %vm47, %v40, 0
    %72 = vmatpush.msra.mxu0 0.0
    %73 = vmatpush.msra.mxu0 0.0
    %74 = vmatpush.msra.mxu0 0.0
    %75 = vmatpush.msra.mxu0 0.0
    %76 = vmatpush.msra.mxu0 0.0
    %77 = vmatpush.msra.mxu0 0.0
    %78 = vmatpush.msra.mxu0 0.0
    %79 = vmatpush.msra.mxu0 0.0
    %80 = vmatpush.msra.mxu0 0.0
    %81 = vmatpush.msra.mxu0 0.0
    %82 = vmatpush.msra.mxu0 0.0
    %83 = vmatpush.msra.mxu0 0.0
    %84 = vmatpush.msra.mxu0 0.0
    %85 = vmatpush.msra.mxu0 0.0
    %86 = vmatpush.msra.mxu0 %v42
    %87 = vmatpush.msra.mxu0 %v41
    %88 = vmatmul.f32.gmra.mxu0 %v49
    %v89 = vpop.f32.mrf.mxu0
    %v90 = vadd.f32 %v45, %v89
    %91 = vmatmul.f32.gmra.mxu0 %v52
    %v92 = vpop.f32.mrf.mxu0
    %v93 = vadd.f32 %v45, %v92
    %94 = vmatmul.f32.gmra.mxu0 %v55
    %v95 = vpop.f32.mrf.mxu0
    %v96 = vadd.f32 %v45, %v95
    %97 = vmatmul.f32.gmra.mxu0 %v58
    %v98 = vpop.f32.mrf.mxu0
    %v99 = vadd.f32 %v45, %v98
    %100 = vmatmul.f32.gmra.mxu0 %v61
    %v101 = vpop.f32.mrf.mxu0
    %v102 = vadd.f32 %v45, %v101
    %103 = vmatmul.f32.gmra.mxu0 %v64
    %v104 = vpop.f32.mrf.mxu0
    %v105 = vadd.f32 %v45, %v104
    %106 = vmatmul.f32.gmra.mxu0 %v67
    %v107 = vpop.f32.mrf.mxu0
    %v108 = vadd.f32 %v45, %v107
    %109 = vmatmul.f32.gmra.mxu0 %v70
    %v110 = vpop.f32.mrf.mxu0
    %v111 = vadd.f32 %v45, %v110
    %112 = vdwg.mxu0
    %v113 = vmul.f32 %v90, %v90
    %v114 = vmul.f32 %v93, %v93
    %v115 = vmul.f32 %v96, %v96
    %v116 = vmul.f32 %v99, %v99
    %v117 = vmul.f32 %v102, %v102
    %v118 = vmul.f32 %v105, %v105
    %v119 = vmul.f32 %v108, %v108
    %v120 = vmul.f32 %v111, %v111
    %v121 = vmul.f32 %v90, %v113
    %v122 = vmul.f32 %v93, %v114
    %v123 = vmul.f32 %v96, %v115
    %v124 = vmul.f32 %v99, %v116
    %v125 = vmul.f32 %v102, %v117
    %v126 = vmul.f32 %v105, %v118
    %v127 = vmul.f32 %v108, %v119
    %v128 = vmul.f32 %v111, %v120
    %v129 = vmul.f32 %v121, 0.044715
    %v130 = vmul.f32 %v122, 0.044715
    %v131 = vmul.f32 %v123, 0.044715
    %v132 = vmul.f32 %v124, 0.044715
    %v133 = vmul.f32 %v125, 0.044715
    %v134 = vmul.f32 %v126, 0.044715
    %v135 = vmul.f32 %v127, 0.044715
    %v136 = vmul.f32 %v128, 0.044715
    %v137 = vadd.f32 %v90, %v129
    %v138 = vadd.f32 %v93, %v130
    %v139 = vadd.f32 %v96, %v131
    %v140 = vadd.f32 %v99, %v132
    %v141 = vadd.f32 %v102, %v133
    %v142 = vadd.f32 %v105, %v134
    %v143 = vadd.f32 %v108, %v135
    %v144 = vadd.f32 %v111, %v136
    %v145 = vmul.f32 %v137, 0.7978846
    %v146 = vmul.f32 %v138, 0.7978846
    %v147 = vmul.f32 %v139, 0.7978846
    %v148 = vmul.f32 %v140, 0.7978846
    %v149 = vmul.f32 %v141, 0.7978846
    %v150 = vmul.f32 %v142, 0.7978846
    %v151 = vmul.f32 %v143, 0.7978846
    %v152 = vmul.f32 %v144, 0.7978846
    %v153 = vtanh.pop %v145
    %v154 = vtanh.pop %v146
    %v155 = vtanh.pop %v147
    %v156 = vtanh.pop %v148
    %v157 = vtanh.pop %v149
    %v158 = vtanh.pop %v150
    %v159 = vtanh.pop %v151
    %v160 = vtanh.pop %v152
    %v161 = vadd.f32 %v153, 1.0
    %v162 = vadd.f32 %v154, 1.0
    %v163 = vadd.f32 %v155, 1.0
    %v164 = vadd.f32 %v156, 1.0
    %v165 = vadd.f32 %v157, 1.0
    %v166 = vadd.f32 %v158, 1.0
    %v167 = vadd.f32 %v159, 1.0
    %v168 = vadd.f32 %v160, 1.0
    %v169 = vmul.f32 %v161, 0.5
    %v170 = vmul.f32 %v162, 0.5
    %v171 = vmul.f32 %v163, 0.5
    %v172 = vmul.f32 %v164, 0.5
    %v173 = vmul.f32 %v165, 0.5
    %v174 = vmul.f32 %v166, 0.5
    %v175 = vmul.f32 %v167, 0.5
    %v176 = vmul.f32 %v168, 0.5
    %v177 = vmul.f32 %v90, %v169
    %v178 = vmul.f32 %v93, %v170
    %v179 = vmul.f32 %v96, %v171
    %v180 = vmul.f32 %v99, %v172
    %v181 = vmul.f32 %v102, %v173
    %v182 = vmul.f32 %v105, %v174
    %v183 = vmul.f32 %v108, %v175
    %v184 = vmul.f32 %v111, %v176
    %v185 = vrot.slane %v179, 4
    %vm186 = vcmask 1047556
    %v187 = vsel %vm186, %v185, %v177
    %v188 = vrot.slane %v177, 4
    %v189 = vsel %vm186, %v179, %v188
    %v191 = vunpack.c.l.s4 1983009808
    %v192 = vunpack.c.0.s8 %v191
    %v193 = vperm.slane %v187, %v192
    %v195 = vunpack.c.l.s4 1983009808
    %v196 = vunpack.c.0.s8 %v195
    %v197 = vperm.slane %v189, %v196
    %v198 = vrot.slane %v180, 4
    %v199 = vsel %vm186, %v198, %v178
    %v200 = vrot.slane %v178, 4
    %v201 = vsel %vm186, %v180, %v200
    %v203 = vunpack.c.l.s4 1983009808
    %v204 = vunpack.c.0.s8 %v203
    %v205 = vperm.slane %v199, %v204
    %v207 = vunpack.c.l.s4 1983009808
    %v208 = vunpack.c.0.s8 %v207
    %v209 = vperm.slane %v201, %v208
    %v210 = vrot.slane %v183, 4
    %v211 = vsel %vm186, %v210, %v181
    %v212 = vrot.slane %v181, 4
    %v213 = vsel %vm186, %v183, %v212
    %v215 = vunpack.c.l.s4 1983009808
    %v216 = vunpack.c.0.s8 %v215
    %v217 = vperm.slane %v211, %v216
    %v219 = vunpack.c.l.s4 1983009808
    %v220 = vunpack.c.0.s8 %v219
    %v221 = vperm.slane %v213, %v220
    %v222 = vrot.slane %v184, 4
    %v223 = vsel %vm186, %v222, %v182
    %v224 = vrot.slane %v182, 4
    %v225 = vsel %vm186, %v184, %v224
    %v227 = vunpack.c.l.s4 1983009808
    %v228 = vunpack.c.0.s8 %v227
    %v229 = vperm.slane %v223, %v228
    %v231 = vunpack.c.l.s4 1983009808
    %v232 = vunpack.c.0.s8 %v231
    %v233 = vperm.slane %v225, %v232
    %v234 = vrot.slane %v205, 4
    %v235 = vsel %vm186, %v234, %v193
    %v236 = vrot.slane %v193, 4
    %v237 = vsel %vm186, %v205, %v236
    %v239 = vunpack.c.l.s4 1934713408
    %v240 = vunpack.c.0.s8 %v239
    %v241 = vperm.slane %v235, %v240
    %v243 = vunpack.c.l.s4 1934713408
    %v244 = vunpack.c.0.s8 %v243
    %v245 = vperm.slane %v237, %v244
    %v246 = vrot.slane %v209, 4
    %v247 = vsel %vm186, %v246, %v197
    %v248 = vrot.slane %v197, 4
    %v249 = vsel %vm186, %v209, %v248
    %v251 = vunpack.c.l.s4 1934713408
    %v252 = vunpack.c.0.s8 %v251
    %v253 = vperm.slane %v247, %v252
    %v255 = vunpack.c.l.s4 1934713408
    %v256 = vunpack.c.0.s8 %v255
    %v257 = vperm.slane %v249, %v256
    %v258 = vrot.slane %v229, 4
    %v259 = vsel %vm186, %v258, %v217
    %v260 = vrot.slane %v217, 4
    %v261 = vsel %vm186, %v229, %v260
    %v263 = vunpack.c.l.s4 1934713408
    %v264 = vunpack.c.0.s8 %v263
    %v265 = vperm.slane %v259, %v264
    %v267 = vunpack.c.l.s4 1934713408
    %v268 = vunpack.c.0.s8 %v267
    %v269 = vperm.slane %v261, %v268
    %v270 = vrot.slane %v233, 4
    %v271 = vsel %vm186, %v270, %v221
    %v272 = vrot.slane %v221, 4
    %v273 = vsel %vm186, %v233, %v272
    %v275 = vunpack.c.l.s4 1934713408
    %v276 = vunpack.c.0.s8 %v275
    %v277 = vperm.slane %v271, %v276
    %v279 = vunpack.c.l.s4 1934713408
    %v280 = vunpack.c.0.s8 %v279
    %v281 = vperm.slane %v273, %v280
    %v282 = vrot.slane %v265, 4
    %v283 = vsel %vm186, %v282, %v241
    %v284 = vrot.slane %v241, 4
    %v285 = vsel %vm186, %v265, %v284
    %v286 = vrot.slane %v269, 4
    %v287 = vsel %vm186, %v286, %v245
    %v288 = vrot.slane %v245, 4
    %v289 = vsel %vm186, %v269, %v288
    %v290 = vrot.slane %v277, 4
    %v291 = vsel %vm186, %v290, %v253
    %v292 = vrot.slane %v253, 4
    %v293 = vsel %vm186, %v277, %v292
    %v294 = vrot.slane %v281, 4
    %v295 = vsel %vm186, %v294, %v257
    %v296 = vrot.slane %v257, 4
    %v297 = vsel %vm186, %v281, %v296
    %v298 = vrot.slane %v287, 4
    %v299 = vsel %vm186, %v298, %v283
    %v300 = vrot.slane %v283, 4
    %v301 = vsel %vm186, %v287, %v300
    %v303 = vunpack.c.l.s4 1983009808
    %v304 = vunpack.c.0.s8 %v303
    %v305 = vperm.slane %v299, %v304
    %v307 = vunpack.c.l.s4 1983009808
    %v308 = vunpack.c.0.s8 %v307
    %v309 = vperm.slane %v301, %v308
    %v310 = vrot.slane %v289, 4
    %v311 = vsel %vm186, %v310, %v285
    %v312 = vrot.slane %v285, 4
    %v313 = vsel %vm186, %v289, %v312
    %v315 = vunpack.c.l.s4 1983009808
    %v316 = vunpack.c.0.s8 %v315
    %v317 = vperm.slane %v311, %v316
    %v319 = vunpack.c.l.s4 1983009808
    %v320 = vunpack.c.0.s8 %v319
    %v321 = vperm.slane %v313, %v320
    %v322 = vrot.slane %v295, 4
    %v323 = vsel %vm186, %v322, %v291
    %v324 = vrot.slane %v291, 4
    %v325 = vsel %vm186, %v295, %v324
    %v327 = vunpack.c.l.s4 1983009808
    %v328 = vunpack.c.0.s8 %v327
    %v329 = vperm.slane %v323, %v328
    %v331 = vunpack.c.l.s4 1983009808
    %v332 = vunpack.c.0.s8 %v331
    %v333 = vperm.slane %v325, %v332
    %v334 = vrot.slane %v297, 4
    %v335 = vsel %vm186, %v334, %v293
    %v336 = vrot.slane %v293, 4
    %v337 = vsel %vm186, %v297, %v336
    %v339 = vunpack.c.l.s4 1983009808
    %v340 = vunpack.c.0.s8 %v339
    %v341 = vperm.slane %v335, %v340
    %v343 = vunpack.c.l.s4 1983009808
    %v344 = vunpack.c.0.s8 %v343
    %v345 = vperm.slane %v337, %v344
    %v346 = vrot.slane %v317, 4
    %v347 = vsel %vm186, %v346, %v305
    %v348 = vrot.slane %v305, 4
    %v349 = vsel %vm186, %v317, %v348
    %v351 = vunpack.c.l.s4 1934713408
    %v352 = vunpack.c.0.s8 %v351
    %v353 = vperm.slane %v347, %v352
    %v355 = vunpack.c.l.s4 1934713408
    %v356 = vunpack.c.0.s8 %v355
    %v357 = vperm.slane %v349, %v356
    %v358 = vrot.slane %v321, 4
    %v359 = vsel %vm186, %v358, %v309
    %v360 = vrot.slane %v309, 4
    %v361 = vsel %vm186, %v321, %v360
    %v363 = vunpack.c.l.s4 1934713408
    %v364 = vunpack.c.0.s8 %v363
    %v365 = vperm.slane %v359, %v364
    %v367 = vunpack.c.l.s4 1934713408
    %v368 = vunpack.c.0.s8 %v367
    %v369 = vperm.slane %v361, %v368
    %v370 = vrot.slane %v341, 4
    %v371 = vsel %vm186, %v370, %v329
    %v372 = vrot.slane %v329, 4
    %v373 = vsel %vm186, %v341, %v372
    %v375 = vunpack.c.l.s4 1934713408
    %v376 = vunpack.c.0.s8 %v375
    %v377 = vperm.slane %v371, %v376
    %v379 = vunpack.c.l.s4 1934713408
    %v380 = vunpack.c.0.s8 %v379
    %v381 = vperm.slane %v373, %v380
    %v382 = vrot.slane %v345, 4
    %v383 = vsel %vm186, %v382, %v333
    %v384 = vrot.slane %v333, 4
    %v385 = vsel %vm186, %v345, %v384
    %v387 = vunpack.c.l.s4 1934713408
    %v388 = vunpack.c.0.s8 %v387
    %v389 = vperm.slane %v383, %v388
    %v391 = vunpack.c.l.s4 1934713408
    %v392 = vunpack.c.0.s8 %v391
    %v393 = vperm.slane %v385, %v392
    %v394 = vrot.slane %v377, 4
    %v395 = vsel %vm186, %v394, %v353
    %v396 = vrot.slane %v353, 4
    %v397 = vsel %vm186, %v377, %v396
    %v398 = vrot.slane %v381, 4
    %v399 = vsel %vm186, %v398, %v357
    %v400 = vrot.slane %v357, 4
    %v401 = vsel %vm186, %v381, %v400
    %v402 = vrot.slane %v389, 4
    %v403 = vsel %vm186, %v402, %v365
    %v404 = vrot.slane %v365, 4
    %v405 = vsel %vm186, %v389, %v404
    %v406 = vrot.slane %v393, 4
    %v407 = vsel %vm186, %v406, %v369
    %v408 = vrot.slane %v369, 4
    %v409 = vsel %vm186, %v393, %v408
    %411 = vrot.lane.b32.xlu0 %v397, 64
    %v412 = vpop.permute.xlu0 %411
    %415 = vrot.lane.b32.xlu0 %v401, 64
    %v416 = vpop.permute.xlu0 %415
    %419 = vrot.lane.b32.xlu0 %v405, 64
    %v420 = vpop.permute.xlu0 %419
    %423 = vrot.lane.b32.xlu0 %v409, 64
    %v424 = vpop.permute.xlu0 %423
    %vm426 = vcmask 523264
    %v427 = vsel %vm426, %v395, %v412
    %v428 = vsel %vm426, %v399, %v416
    %v429 = vsel %vm426, %v403, %v420
    %v430 = vsel %vm426, %v407, %v424
    %v431 = vld [vmem:[%s3] sm:$0xff]
    %v432 = vld [vmem:[%s3 + $0x8] sm:$0xff]
    %v433 = vld [vmem:[%s3 + $0x10] sm:$0xff]
    %v434 = vld [vmem:[%s3 + $0x18] sm:$0xff]
    %v435 = vld [vmem:[%s4] sm:$0xff]
    %v436 = vld [vmem:[%s4 + $0x8] sm:$0xff]
    %v437 = vld [vmem:[%s4 + $0x10] sm:$0xff]
    %v438 = vld [vmem:[%s4 + $0x18] sm:$0xff]
    %440 = vset.pattern.permute.xlu0 0
    %441 = vperm.xlu0 %440, %v435
    %v442 = vpop.permute.xlu0 %441
    %445 = vset.pattern.permute.xlu0 0
    %446 = vperm.xlu0 %445, %v436
    %v447 = vpop.permute.xlu0 %446
    %450 = vset.pattern.permute.xlu0 0
    %451 = vperm.xlu0 %450, %v437
    %v452 = vpop.permute.xlu0 %451
    %455 = vset.pattern.permute.xlu0 0
    %456 = vperm.xlu0 %455, %v438
    %v457 = vpop.permute.xlu0 %456
    %vm459 = vcmask 64512
    %v461 = vsel %vm459, %v431, 0
    %v464 = vsel %vm459, %v432, 0
    %v467 = vsel %vm459, %v433, 0
    %v470 = vsel %vm459, %v434, 0
    %472 = vmatpush.msra.mxu0 0.0
    %473 = vmatpush.msra.mxu0 0.0
    %474 = vmatpush.msra.mxu0 0.0
    %475 = vmatpush.msra.mxu0 0.0
    %476 = vmatpush.msra.mxu0 0.0
    %477 = vmatpush.msra.mxu0 0.0
    %478 = vmatpush.msra.mxu0 0.0
    %479 = vmatpush.msra.mxu0 0.0
    %480 = vmatpush.msra.mxu0 0.0
    %481 = vmatpush.msra.mxu0 0.0
    %482 = vmatpush.msra.mxu0 0.0
    %483 = vmatpush.msra.mxu0 0.0
    %484 = vmatpush.msra.mxu0 0.0
    %485 = vmatpush.msra.mxu0 0.0
    %486 = vmatpush.msra.mxu0 0.0
    %487 = vmatpush.msra.mxu0 %v427
    %488 = vmatmul.f32.gmra.mxu0 %v461
    %v489 = vpop.f32.mrf.mxu0
    %v490 = vadd.f32 %v442, %v489
    %491 = vmatmul.f32.gmra.mxu0 %v464
    %v492 = vpop.f32.mrf.mxu0
    %v493 = vadd.f32 %v447, %v492
    %494 = vmatmul.f32.gmra.mxu0 %v467
    %v495 = vpop.f32.mrf.mxu0
    %v496 = vadd.f32 %v452, %v495
    %497 = vmatmul.f32.gmra.mxu0 %v470
    %v498 = vpop.f32.mrf.mxu0
    %v499 = vadd.f32 %v457, %v498
    %500 = vdwg.mxu0
    %501 = vmatpush.msra.mxu0 0.0
    %502 = vmatpush.msra.mxu0 0.0
    %503 = vmatpush.msra.mxu0 0.0
    %504 = vmatpush.msra.mxu0 0.0
    %505 = vmatpush.msra.mxu0 0.0
    %506 = vmatpush.msra.mxu0 0.0
    %507 = vmatpush.msra.mxu0 0.0
    %508 = vmatpush.msra.mxu0 0.0
    %509 = vmatpush.msra.mxu0 0.0
    %510 = vmatpush.msra.mxu0 0.0
    %511 = vmatpush.msra.mxu0 0.0
    %512 = vmatpush.msra.mxu0 0.0
    %513 = vmatpush.msra.mxu0 0.0
    %514 = vmatpush.msra.mxu0 0.0
    %515 = vmatpush.msra.mxu0 0.0
    %516 = vmatpush.msra.mxu0 %v428
    %517 = vmatmul.f32.gmra.mxu0 %v461
    %v518 = vpop.f32.mrf.mxu0
    %v519 = vadd.f32 %v442, %v518
    %520 = vmatmul.f32.gmra.mxu0 %v464
    %v521 = vpop.f32.mrf.mxu0
    %v522 = vadd.f32 %v447, %v521
    %523 = vmatmul.f32.gmra.mxu0 %v467
    %v524 = vpop.f32.mrf.mxu0
    %v525 = vadd.f32 %v452, %v524
    %526 = vmatmul.f32.gmra.mxu0 %v470
    %v527 = vpop.f32.mrf.mxu0
    %v528 = vadd.f32 %v457, %v527
    %529 = vdwg.mxu0
    %530 = vmatpush.msra.mxu0 0.0
    %531 = vmatpush.msra.mxu0 0.0
    %532 = vmatpush.msra.mxu0 0.0
    %533 = vmatpush.msra.mxu0 0.0
    %534 = vmatpush.msra.mxu0 0.0
    %535 = vmatpush.msra.mxu0 0.0
    %536 = vmatpush.msra.mxu0 0.0
    %537 = vmatpush.msra.mxu0 0.0
    %538 = vmatpush.msra.mxu0 0.0
    %539 = vmatpush.msra.mxu0 0.0
    %540 = vmatpush.msra.mxu0 0.0
    %541 = vmatpush.msra.mxu0 0.0
    %542 = vmatpush.msra.mxu0 0.0
    %543 = vmatpush.msra.mxu0 0.0
    %544 = vmatpush.msra.mxu0 0.0
    %545 = vmatpush.msra.mxu0 %v429
    %546 = vmatmul.f32.gmra.mxu0 %v461
    %v547 = vpop.f32.mrf.mxu0
    %v548 = vadd.f32 %v442, %v547
    %549 = vmatmul.f32.gmra.mxu0 %v464
    %v550 = vpop.f32.mrf.mxu0
    %v551 = vadd.f32 %v447, %v550
    %552 = vmatmul.f32.gmra.mxu0 %v467
    %v553 = vpop.f32.mrf.mxu0
    %v554 = vadd.f32 %v452, %v553
    %555 = vmatmul.f32.gmra.mxu0 %v470
    %v556 = vpop.f32.mrf.mxu0
    %v557 = vadd.f32 %v457, %v556
    %558 = vdwg.mxu0
    %559 = vmatpush.msra.mxu0 0.0
    %560 = vmatpush.msra.mxu0 0.0
    %561 = vmatpush.msra.mxu0 0.0
    %562 = vmatpush.msra.mxu0 0.0
    %563 = vmatpush.msra.mxu0 0.0
    %564 = vmatpush.msra.mxu0 0.0
    %565 = vmatpush.msra.mxu0 0.0
    %566 = vmatpush.msra.mxu0 0.0
    %567 = vmatpush.msra.mxu0 0.0
    %568 = vmatpush.msra.mxu0 0.0
    %569 = vmatpush.msra.mxu0 0.0
    %570 = vmatpush.msra.mxu0 0.0
    %571 = vmatpush.msra.mxu0 0.0
    %572 = vmatpush.msra.mxu0 0.0
    %573 = vmatpush.msra.mxu0 0.0
    %574 = vmatpush.msra.mxu0 %v430
    %575 = vmatmul.f32.gmra.mxu0 %v461
    %v576 = vpop.f32.mrf.mxu0
    %v577 = vadd.f32 %v442, %v576
    %578 = vmatmul.f32.gmra.mxu0 %v464
    %v579 = vpop.f32.mrf.mxu0
    %v580 = vadd.f32 %v447, %v579
    %581 = vmatmul.f32.gmra.mxu0 %v467
    %v582 = vpop.f32.mrf.mxu0
    %v583 = vadd.f32 %v452, %v582
    %584 = vmatmul.f32.gmra.mxu0 %v470
    %v585 = vpop.f32.mrf.mxu0
    %v586 = vadd.f32 %v457, %v585
    %587 = vdwg.mxu0
    %v588 = vmul.f32 %v490, %v490
    %v589 = vmul.f32 %v519, %v519
    %v590 = vmul.f32 %v548, %v548
    %v591 = vmul.f32 %v577, %v577
    %v592 = vmul.f32 %v493, %v493
    %v593 = vmul.f32 %v522, %v522
    %v594 = vmul.f32 %v551, %v551
    %v595 = vmul.f32 %v580, %v580
    %v596 = vmul.f32 %v496, %v496
    %v597 = vmul.f32 %v525, %v525
    %v598 = vmul.f32 %v554, %v554
    %v599 = vmul.f32 %v583, %v583
    %v600 = vmul.f32 %v499, %v499
    %v601 = vmul.f32 %v528, %v528
    %v602 = vmul.f32 %v557, %v557
    %v603 = vmul.f32 %v586, %v586
    %v604 = vmul.f32 %v490, %v588
    %v605 = vmul.f32 %v519, %v589
    %v606 = vmul.f32 %v548, %v590
    %v607 = vmul.f32 %v577, %v591
    %v608 = vmul.f32 %v493, %v592
    %v609 = vmul.f32 %v522, %v593
    %v610 = vmul.f32 %v551, %v594
    %v611 = vmul.f32 %v580, %v595
    %v612 = vmul.f32 %v496, %v596
    %v613 = vmul.f32 %v525, %v597
    %v614 = vmul.f32 %v554, %v598
    %v615 = vmul.f32 %v583, %v599
    %v616 = vmul.f32 %v499, %v600
    %v617 = vmul.f32 %v528, %v601
    %v618 = vmul.f32 %v557, %v602
    %v619 = vmul.f32 %v586, %v603
    %v620 = vmul.f32 %v604, 0.044715
    %v621 = vmul.f32 %v605, 0.044715
    %v622 = vmul.f32 %v606, 0.044715
    %v623 = vmul.f32 %v607, 0.044715
    %v624 = vmul.f32 %v608, 0.044715
    %v625 = vmul.f32 %v609, 0.044715
    %v626 = vmul.f32 %v610, 0.044715
    %v627 = vmul.f32 %v611, 0.044715
    %v628 = vmul.f32 %v612, 0.044715
    %v629 = vmul.f32 %v613, 0.044715
    %v630 = vmul.f32 %v614, 0.044715
    %v631 = vmul.f32 %v615, 0.044715
    %v632 = vmul.f32 %v616, 0.044715
    %v633 = vmul.f32 %v617, 0.044715
    %v634 = vmul.f32 %v618, 0.044715
    %v635 = vmul.f32 %v619, 0.044715
    %v636 = vadd.f32 %v490, %v620
    %v637 = vadd.f32 %v519, %v621
    %v638 = vadd.f32 %v548, %v622
    %v639 = vadd.f32 %v577, %v623
    %v640 = vadd.f32 %v493, %v624
    %v641 = vadd.f32 %v522, %v625
    %v642 = vadd.f32 %v551, %v626
    %v643 = vadd.f32 %v580, %v627
    %v644 = vadd.f32 %v496, %v628
    %v645 = vadd.f32 %v525, %v629
    %v646 = vadd.f32 %v554, %v630
    %v647 = vadd.f32 %v583, %v631
    %v648 = vadd.f32 %v499, %v632
    %v649 = vadd.f32 %v528, %v633
    %v650 = vadd.f32 %v557, %v634
    %v651 = vadd.f32 %v586, %v635
    %v652 = vmul.f32 %v636, 0.7978846
    %v653 = vmul.f32 %v637, 0.7978846
    %v654 = vmul.f32 %v638, 0.7978846
    %v655 = vmul.f32 %v639, 0.7978846
    %v656 = vmul.f32 %v640, 0.7978846
    %v657 = vmul.f32 %v641, 0.7978846
    %v658 = vmul.f32 %v642, 0.7978846
    %v659 = vmul.f32 %v643, 0.7978846
    %v660 = vmul.f32 %v644, 0.7978846
    %v661 = vmul.f32 %v645, 0.7978846
    %v662 = vmul.f32 %v646, 0.7978846
    %v663 = vmul.f32 %v647, 0.7978846
    %v664 = vmul.f32 %v648, 0.7978846
    %v665 = vmul.f32 %v649, 0.7978846
    %v666 = vmul.f32 %v650, 0.7978846
    %v667 = vmul.f32 %v651, 0.7978846
    %v668 = vtanh.pop %v652
    %v669 = vtanh.pop %v653
    %v670 = vtanh.pop %v654
    %v671 = vtanh.pop %v655
    %v672 = vtanh.pop %v656
    %v673 = vtanh.pop %v657
    %v674 = vtanh.pop %v658
    %v675 = vtanh.pop %v659
    %v676 = vtanh.pop %v660
    %v677 = vtanh.pop %v661
    %v678 = vtanh.pop %v662
    %v679 = vtanh.pop %v663
    %v680 = vtanh.pop %v664
    %v681 = vtanh.pop %v665
    %v682 = vtanh.pop %v666
    %v683 = vtanh.pop %v667
    %v684 = vadd.f32 %v668, 1.0
    %v685 = vadd.f32 %v669, 1.0
    %v686 = vadd.f32 %v670, 1.0
    %v687 = vadd.f32 %v671, 1.0
    %v688 = vadd.f32 %v672, 1.0
    %v689 = vadd.f32 %v673, 1.0
    %v690 = vadd.f32 %v674, 1.0
    %v691 = vadd.f32 %v675, 1.0
    %v692 = vadd.f32 %v676, 1.0
    %v693 = vadd.f32 %v677, 1.0
    %v694 = vadd.f32 %v678, 1.0
    %v695 = vadd.f32 %v679, 1.0
    %v696 = vadd.f32 %v680, 1.0
    %v697 = vadd.f32 %v681, 1.0
    %v698 = vadd.f32 %v682, 1.0
    %v699 = vadd.f32 %v683, 1.0
    %v700 = vmul.f32 %v684, 0.5
    %v701 = vmul.f32 %v685, 0.5
    %v702 = vmul.f32 %v686, 0.5
    %v703 = vmul.f32 %v687, 0.5
    %v704 = vmul.f32 %v688, 0.5
    %v705 = vmul.f32 %v689, 0.5
    %v706 = vmul.f32 %v690, 0.5
    %v707 = vmul.f32 %v691, 0.5
    %v708 = vmul.f32 %v692, 0.5
    %v709 = vmul.f32 %v693, 0.5
    %v710 = vmul.f32 %v694, 0.5
    %v711 = vmul.f32 %v695, 0.5
    %v712 = vmul.f32 %v696, 0.5
    %v713 = vmul.f32 %v697, 0.5
    %v714 = vmul.f32 %v698, 0.5
    %v715 = vmul.f32 %v699, 0.5
    %v716 = vmul.f32 %v490, %v700
    %v717 = vmul.f32 %v519, %v701
    %v718 = vmul.f32 %v548, %v702
    %v719 = vmul.f32 %v577, %v703
    %v720 = vmul.f32 %v493, %v704
    %v721 = vmul.f32 %v522, %v705
    %v722 = vmul.f32 %v551, %v706
    %v723 = vmul.f32 %v580, %v707
    %v724 = vmul.f32 %v496, %v708
    %v725 = vmul.f32 %v525, %v709
    %v726 = vmul.f32 %v554, %v710
    %v727 = vmul.f32 %v583, %v711
    %v728 = vmul.f32 %v499, %v712
    %v729 = vmul.f32 %v528, %v713
    %v730 = vmul.f32 %v557, %v714
    %v731 = vmul.f32 %v586, %v715
    %v732 = vld [vmem:[%s5] sm:$0xff]
    %v733 = vld [vmem:[%s6] sm:$0xff]
    %735 = vset.pattern.permute.xlu0 0
    %736 = vperm.xlu0 %735, %v733
    %v737 = vpop.permute.xlu0 %736
    %vm739 = vcmask 261120
    %v741 = vsel %vm739, %v732, 0
    %743 = vmatpush.msra.mxu0 0.0
    %744 = vmatpush.msra.mxu0 0.0
    %745 = vmatpush.msra.mxu0 0.0
    %746 = vmatpush.msra.mxu0 0.0
    %747 = vmatpush.msra.mxu0 0.0
    %748 = vmatpush.msra.mxu0 0.0
    %749 = vmatpush.msra.mxu0 0.0
    %750 = vmatpush.msra.mxu0 0.0
    %751 = vmatpush.msra.mxu0 0.0
    %752 = vmatpush.msra.mxu0 0.0
    %753 = vmatpush.msra.mxu0 0.0
    %754 = vmatpush.msra.mxu0 0.0
    %755 = vmatpush.msra.mxu0 %v728
    %756 = vmatpush.msra.mxu0 %v724
    %757 = vmatpush.msra.mxu0 %v720
    %758 = vmatpush.msra.mxu0 %v716
    %759 = vmatmul.f32.gmra.mxu0 %v741
    %v760 = vpop.f32.mrf.mxu0
    %v761 = vadd.f32 %v737, %v760
    %762 = vdwg.mxu0
    %763 = vmatpush.msra.mxu0 0.0
    %764 = vmatpush.msra.mxu0 0.0
    %765 = vmatpush.msra.mxu0 0.0
    %766 = vmatpush.msra.mxu0 0.0
    %767 = vmatpush.msra.mxu0 0.0
    %768 = vmatpush.msra.mxu0 0.0
    %769 = vmatpush.msra.mxu0 0.0
    %770 = vmatpush.msra.mxu0 0.0
    %771 = vmatpush.msra.mxu0 0.0
    %772 = vmatpush.msra.mxu0 0.0
    %773 = vmatpush.msra.mxu0 0.0
    %774 = vmatpush.msra.mxu0 0.0
    %775 = vmatpush.msra.mxu0 %v729
    %776 = vmatpush.msra.mxu0 %v725
    %777 = vmatpush.msra.mxu0 %v721
    %778 = vmatpush.msra.mxu0 %v717
    %779 = vmatmul.f32.gmra.mxu0 %v741
    %v780 = vpop.f32.mrf.mxu0
    %v781 = vadd.f32 %v737, %v780
    %782 = vdwg.mxu0
    %783 = vmatpush.msra.mxu0 0.0
    %784 = vmatpush.msra.mxu0 0.0
    %785 = vmatpush.msra.mxu0 0.0
    %786 = vmatpush.msra.mxu0 0.0
    %787 = vmatpush.msra.mxu0 0.0
    %788 = vmatpush.msra.mxu0 0.0
    %789 = vmatpush.msra.mxu0 0.0
    %790 = vmatpush.msra.mxu0 0.0
    %791 = vmatpush.msra.mxu0 0.0
    %792 = vmatpush.msra.mxu0 0.0
    %793 = vmatpush.msra.mxu0 0.0
    %794 = vmatpush.msra.mxu0 0.0
    %795 = vmatpush.msra.mxu0 %v730
    %796 = vmatpush.msra.mxu0 %v726
    %797 = vmatpush.msra.mxu0 %v722
    %798 = vmatpush.msra.mxu0 %v718
    %799 = vmatmul.f32.gmra.mxu0 %v741
    %v800 = vpop.f32.mrf.mxu0
    %v801 = vadd.f32 %v737, %v800
    %802 = vdwg.mxu0
    %803 = vmatpush.msra.mxu0 0.0
    %804 = vmatpush.msra.mxu0 0.0
    %805 = vmatpush.msra.mxu0 0.0
    %806 = vmatpush.msra.mxu0 0.0
    %807 = vmatpush.msra.mxu0 0.0
    %808 = vmatpush.msra.mxu0 0.0
    %809 = vmatpush.msra.mxu0 0.0
    %810 = vmatpush.msra.mxu0 0.0
    %811 = vmatpush.msra.mxu0 0.0
    %812 = vmatpush.msra.mxu0 0.0
    %813 = vmatpush.msra.mxu0 0.0
    %814 = vmatpush.msra.mxu0 0.0
    %815 = vmatpush.msra.mxu0 %v731
    %816 = vmatpush.msra.mxu0 %v727
    %817 = vmatpush.msra.mxu0 %v723
    %818 = vmatpush.msra.mxu0 %v719
    %819 = vmatmul.f32.gmra.mxu0 %v741
    %v820 = vpop.f32.mrf.mxu0
    %v821 = vadd.f32 %v737, %v820
    %822 = vdwg.mxu0
    %v823 = vmul.f32 %v761, %v761
    %v824 = vmul.f32 %v781, %v781
    %v825 = vmul.f32 %v801, %v801
    %v826 = vmul.f32 %v821, %v821
    %v827 = vmul.f32 %v761, %v823
    %v828 = vmul.f32 %v781, %v824
    %v829 = vmul.f32 %v801, %v825
    %v830 = vmul.f32 %v821, %v826
    %v831 = vmul.f32 %v827, 0.044715
    %v832 = vmul.f32 %v828, 0.044715
    %v833 = vmul.f32 %v829, 0.044715
    %v834 = vmul.f32 %v830, 0.044715
    %v835 = vadd.f32 %v761, %v831
    %v836 = vadd.f32 %v781, %v832
    %v837 = vadd.f32 %v801, %v833
    %v838 = vadd.f32 %v821, %v834
    %v839 = vmul.f32 %v835, 0.7978846
    %v840 = vmul.f32 %v836, 0.7978846
    %v841 = vmul.f32 %v837, 0.7978846
    %v842 = vmul.f32 %v838, 0.7978846
    %v843 = vtanh.pop %v839
    %v844 = vtanh.pop %v840
    %v845 = vtanh.pop %v841
    %v846 = vtanh.pop %v842
    %v847 = vadd.f32 %v843, 1.0
    %v848 = vadd.f32 %v844, 1.0
    %v849 = vadd.f32 %v845, 1.0
    %v850 = vadd.f32 %v846, 1.0
    %v851 = vmul.f32 %v847, 0.5
    %v852 = vmul.f32 %v848, 0.5
    %v853 = vmul.f32 %v849, 0.5
    %v854 = vmul.f32 %v850, 0.5
    %v855 = vmul.f32 %v761, %v851
    %v856 = vmul.f32 %v781, %v852
    %v857 = vmul.f32 %v801, %v853
    %v858 = vmul.f32 %v821, %v854
    %860 = vrot.lane.b32.xlu0 %v855, 64
    %v861 = vpop.permute.xlu0 %860
    %864 = vrot.lane.b32.xlu0 %v856, 64
    %v865 = vpop.permute.xlu0 %864
    %868 = vrot.lane.b32.xlu0 %v857, 64
    %v869 = vpop.permute.xlu0 %868
    %872 = vrot.lane.b32.xlu0 %v858, 64
    %v873 = vpop.permute.xlu0 %872
    %v875 = vrot.slane %v856, 4
    %v876 = vsel %vm186, %v875, %v855
    %v877 = vrot.slane %v855, 4
    %v878 = vsel %vm186, %v856, %v877
    %v880 = vunpack.c.l.s4 1983009808
    %v881 = vunpack.c.0.s8 %v880
    %v882 = vperm.slane %v876, %v881
    %v884 = vunpack.c.l.s4 1983009808
    %v885 = vunpack.c.0.s8 %v884
    %v886 = vperm.slane %v878, %v885
    %v887 = vrot.slane %v865, 4
    %v888 = vsel %vm186, %v887, %v861
    %v889 = vrot.slane %v861, 4
    %v890 = vsel %vm186, %v865, %v889
    %v892 = vunpack.c.l.s4 1983009808
    %v893 = vunpack.c.0.s8 %v892
    %v894 = vperm.slane %v888, %v893
    %v896 = vunpack.c.l.s4 1983009808
    %v897 = vunpack.c.0.s8 %v896
    %v898 = vperm.slane %v890, %v897
    %v899 = vrot.slane %v858, 4
    %v900 = vsel %vm186, %v899, %v857
    %v901 = vrot.slane %v857, 4
    %v902 = vsel %vm186, %v858, %v901
    %v904 = vunpack.c.l.s4 1983009808
    %v905 = vunpack.c.0.s8 %v904
    %v906 = vperm.slane %v900, %v905
    %v908 = vunpack.c.l.s4 1983009808
    %v909 = vunpack.c.0.s8 %v908
    %v910 = vperm.slane %v902, %v909
    %v911 = vrot.slane %v873, 4
    %v912 = vsel %vm186, %v911, %v869
    %v913 = vrot.slane %v869, 4
    %v914 = vsel %vm186, %v873, %v913
    %v916 = vunpack.c.l.s4 1983009808
    %v917 = vunpack.c.0.s8 %v916
    %v918 = vperm.slane %v912, %v917
    %v920 = vunpack.c.l.s4 1983009808
    %v921 = vunpack.c.0.s8 %v920
    %v922 = vperm.slane %v914, %v921
    %v923 = vrot.slane %v894, 4
    %v924 = vsel %vm186, %v923, %v882
    %v925 = vrot.slane %v882, 4
    %v926 = vsel %vm186, %v894, %v925
    %v928 = vunpack.c.l.s4 1934713408
    %v929 = vunpack.c.0.s8 %v928
    %v930 = vperm.slane %v924, %v929
    %v932 = vunpack.c.l.s4 1934713408
    %v933 = vunpack.c.0.s8 %v932
    %v934 = vperm.slane %v926, %v933
    %v935 = vrot.slane %v898, 4
    %v936 = vsel %vm186, %v935, %v886
    %v937 = vrot.slane %v886, 4
    %v938 = vsel %vm186, %v898, %v937
    %v940 = vunpack.c.l.s4 1934713408
    %v941 = vunpack.c.0.s8 %v940
    %v942 = vperm.slane %v936, %v941
    %v944 = vunpack.c.l.s4 1934713408
    %v945 = vunpack.c.0.s8 %v944
    %v946 = vperm.slane %v938, %v945
    %v947 = vrot.slane %v918, 4
    %v948 = vsel %vm186, %v947, %v906
    %v949 = vrot.slane %v906, 4
    %v950 = vsel %vm186, %v918, %v949
    %v952 = vunpack.c.l.s4 1934713408
    %v953 = vunpack.c.0.s8 %v952
    %v954 = vperm.slane %v948, %v953
    %v956 = vunpack.c.l.s4 1934713408
    %v957 = vunpack.c.0.s8 %v956
    %v958 = vperm.slane %v950, %v957
    %v959 = vrot.slane %v922, 4
    %v960 = vsel %vm186, %v959, %v910
    %v961 = vrot.slane %v910, 4
    %v962 = vsel %vm186, %v922, %v961
    %v964 = vunpack.c.l.s4 1934713408
    %v965 = vunpack.c.0.s8 %v964
    %v966 = vperm.slane %v960, %v965
    %v968 = vunpack.c.l.s4 1934713408
    %v969 = vunpack.c.0.s8 %v968
    %v970 = vperm.slane %v962, %v969
    %v971 = vrot.slane %v954, 4
    %v972 = vsel %vm186, %v971, %v930
    %v973 = vrot.slane %v930, 4
    %v974 = vsel %vm186, %v954, %v973
    %v975 = vrot.slane %v958, 4
    %v976 = vsel %vm186, %v975, %v934
    %v977 = vrot.slane %v934, 4
    %v978 = vsel %vm186, %v958, %v977
    %v979 = vrot.slane %v966, 4
    %v980 = vsel %vm186, %v979, %v942
    %v981 = vrot.slane %v942, 4
    %v982 = vsel %vm186, %v966, %v981
    %v983 = vrot.slane %v970, 4
    %v984 = vsel %vm186, %v983, %v946
    %v985 = vrot.slane %v946, 4
    %v986 = vsel %vm186, %v970, %v985
    %v987 = vrot.slane %v976, 4
    %v988 = vsel %vm186, %v987, %v972
    %v989 = vrot.slane %v972, 4
    %v990 = vsel %vm186, %v976, %v989
    %v992 = vunpack.c.l.s4 1983009808
    %v993 = vunpack.c.0.s8 %v992
    %v994 = vperm.slane %v988, %v993
    %v996 = vunpack.c.l.s4 1983009808
    %v997 = vunpack.c.0.s8 %v996
    %v998 = vperm.slane %v990, %v997
    %v999 = vrot.slane %v978, 4
    %v1000 = vsel %vm186, %v999, %v974
    %v1001 = vrot.slane %v974, 4
    %v1002 = vsel %vm186, %v978, %v1001
    %v1004 = vunpack.c.l.s4 1983009808
    %v1005 = vunpack.c.0.s8 %v1004
    %v1006 = vperm.slane %v1000, %v1005
    %v1008 = vunpack.c.l.s4 1983009808
    %v1009 = vunpack.c.0.s8 %v1008
    %v1010 = vperm.slane %v1002, %v1009
    %v1011 = vrot.slane %v984, 4
    %v1012 = vsel %vm186, %v1011, %v980
    %v1013 = vrot.slane %v980, 4
    %v1014 = vsel %vm186, %v984, %v1013
    %v1016 = vunpack.c.l.s4 1983009808
    %v1017 = vunpack.c.0.s8 %v1016
    %v1018 = vperm.slane %v1012, %v1017
    %v1020 = vunpack.c.l.s4 1983009808
    %v1021 = vunpack.c.0.s8 %v1020
    %v1022 = vperm.slane %v1014, %v1021
    %v1023 = vrot.slane %v986, 4
    %v1024 = vsel %vm186, %v1023, %v982
    %v1025 = vrot.slane %v982, 4
    %v1026 = vsel %vm186, %v986, %v1025
    %v1028 = vunpack.c.l.s4 1983009808
    %v1029 = vunpack.c.0.s8 %v1028
    %v1030 = vperm.slane %v1024, %v1029
    %v1032 = vunpack.c.l.s4 1983009808
    %v1033 = vunpack.c.0.s8 %v1032
    %v1034 = vperm.slane %v1026, %v1033
    %v1035 = vrot.slane %v1006, 4
    %v1036 = vsel %vm186, %v1035, %v994
    %v1037 = vrot.slane %v994, 4
    %v1038 = vsel %vm186, %v1006, %v1037
    %v1040 = vunpack.c.l.s4 1934713408
    %v1041 = vunpack.c.0.s8 %v1040
    %v1042 = vperm.slane %v1036, %v1041
    %v1044 = vunpack.c.l.s4 1934713408
    %v1045 = vunpack.c.0.s8 %v1044
    %v1046 = vperm.slane %v1038, %v1045
    %v1047 = vrot.slane %v1010, 4
    %v1048 = vsel %vm186, %v1047, %v998
    %v1049 = vrot.slane %v998, 4
    %v1050 = vsel %vm186, %v1010, %v1049
    %v1052 = vunpack.c.l.s4 1934713408
    %v1053 = vunpack.c.0.s8 %v1052
    %v1054 = vperm.slane %v1048, %v1053
    %v1056 = vunpack.c.l.s4 1934713408
    %v1057 = vunpack.c.0.s8 %v1056
    %v1058 = vperm.slane %v1050, %v1057
    %v1059 = vrot.slane %v1030, 4
    %v1060 = vsel %vm186, %v1059, %v1018
    %v1061 = vrot.slane %v1018, 4
    %v1062 = vsel %vm186, %v1030, %v1061
    %v1064 = vunpack.c.l.s4 1934713408
    %v1065 = vunpack.c.0.s8 %v1064
    %v1066 = vperm.slane %v1060, %v1065
    %v1068 = vunpack.c.l.s4 1934713408
    %v1069 = vunpack.c.0.s8 %v1068
    %v1070 = vperm.slane %v1062, %v1069
    %v1071 = vrot.slane %v1034, 4
    %v1072 = vsel %vm186, %v1071, %v1022
    %v1073 = vrot.slane %v1022, 4
    %v1074 = vsel %vm186, %v1034, %v1073
    %v1076 = vunpack.c.l.s4 1934713408
    %v1077 = vunpack.c.0.s8 %v1076
    %v1078 = vperm.slane %v1072, %v1077
    %v1080 = vunpack.c.l.s4 1934713408
    %v1081 = vunpack.c.0.s8 %v1080
    %v1082 = vperm.slane %v1074, %v1081
    %v1083 = vrot.slane %v1066, 4
    %v1084 = vsel %vm186, %v1083, %v1042
    %v1085 = vrot.slane %v1042, 4
    %v1086 = vsel %vm186, %v1066, %v1085
    %v1087 = vrot.slane %v1070, 4
    %v1088 = vsel %vm186, %v1087, %v1046
    %v1089 = vrot.slane %v1046, 4
    %v1090 = vsel %vm186, %v1070, %v1089
    %v1091 = vrot.slane %v1078, 4
    %v1092 = vsel %vm186, %v1091, %v1054
    %v1093 = vrot.slane %v1054, 4
    %v1094 = vsel %vm186, %v1078, %v1093
    %v1095 = vrot.slane %v1082, 4
    %v1096 = vsel %vm186, %v1095, %v1058
    %v1097 = vrot.slane %v1058, 4
    %v1098 = vsel %vm186, %v1082, %v1097
    %v1099 = vld [vmem:[%s7] sm:$0xff]
    %v1100 = vld [vmem:[%s7 + $0x8] sm:$0xff]
    %v1101 = vld [vmem:[%s7 + $0x10] sm:$0xff]
    %v1102 = vld [vmem:[%s7 + $0x18] sm:$0xff]
    %v1103 = vld [vmem:[%s7 + $0x20] sm:$0xff]
    %v1104 = vld [vmem:[%s7 + $0x28] sm:$0xff]
    %v1105 = vld [vmem:[%s7 + $0x30] sm:$0xff]
    %v1106 = vld [vmem:[%s7 + $0x38] sm:$0xff]
    %v1107 = vld [vmem:[%s8] sm:$0x1]
    %v1109 = vperm.slane %v1107, 0
    %v1112 = vsel %vm426, %v1084, 0
    %v1115 = vsel %vm426, %v1086, 0
    %v1118 = vsel %vm426, %v1088, 0
    %v1121 = vsel %vm426, %v1090, 0
    %v1124 = vsel %vm426, %v1092, 0
    %v1127 = vsel %vm426, %v1094, 0
    %v1130 = vsel %vm426, %v1096, 0
    %v1133 = vsel %vm426, %v1098, 0
    %1135 = vmatpush.msra.mxu0 0.0
    %1136 = vmatpush.msra.mxu0 0.0
    %1137 = vmatpush.msra.mxu0 0.0
    %1138 = vmatpush.msra.mxu0 0.0
    %1139 = vmatpush.msra.mxu0 0.0
    %1140 = vmatpush.msra.mxu0 0.0
    %1141 = vmatpush.msra.mxu0 0.0
    %1142 = vmatpush.msra.mxu0 0.0
    %1143 = vmatpush.msra.mxu0 %v1106
    %1144 = vmatpush.msra.mxu0 %v1105
    %1145 = vmatpush.msra.mxu0 %v1104
    %1146 = vmatpush.msra.mxu0 %v1103
    %1147 = vmatpush.msra.mxu0 %v1102
    %1148 = vmatpush.msra.mxu0 %v1101
    %1149 = vmatpush.msra.mxu0 %v1100
    %1150 = vmatpush.msra.mxu0 %v1099
    %1151 = vmatmul.f32.gmra.mxu0 %v1112
    %v1152 = vpop.f32.mrf.mxu0
    %v1153 = vadd.f32 %v1109, %v1152
    %1154 = vmatmul.f32.gmra.mxu0 %v1115
    %v1155 = vpop.f32.mrf.mxu0
    %v1156 = vadd.f32 %v1109, %v1155
    %1157 = vmatmul.f32.gmra.mxu0 %v1118
    %v1158 = vpop.f32.mrf.mxu0
    %v1159 = vadd.f32 %v1109, %v1158
    %1160 = vmatmul.f32.gmra.mxu0 %v1121
    %v1161 = vpop.f32.mrf.mxu0
    %v1162 = vadd.f32 %v1109, %v1161
    %1163 = vmatmul.f32.gmra.mxu0 %v1124
    %v1164 = vpop.f32.mrf.mxu0
    %v1165 = vadd.f32 %v1109, %v1164
    %1166 = vmatmul.f32.gmra.mxu0 %v1127
    %v1167 = vpop.f32.mrf.mxu0
    %v1168 = vadd.f32 %v1109, %v1167
    %1169 = vmatmul.f32.gmra.mxu0 %v1130
    %v1170 = vpop.f32.mrf.mxu0
    %v1171 = vadd.f32 %v1109, %v1170
    %1172 = vmatmul.f32.gmra.mxu0 %v1133
    %v1173 = vpop.f32.mrf.mxu0
    %v1174 = vadd.f32 %v1109, %v1173
    %1175 = vdwg.mxu0
    %1176 = vst.msk [vmem:[#allocation2] sm:$0xff] %vm47, %v1153
    %1177 = vst.msk [vmem:[#allocation2 + $0x8] sm:$0xff] %vm47, %v1156
    %1178 = vst.msk [vmem:[#allocation2 + $0x10] sm:$0xff] %vm47, %v1159
    %1179 = vst.msk [vmem:[#allocation2 + $0x18] sm:$0xff] %vm47, %v1162
    %1180 = vst.msk [vmem:[#allocation2 + $0x20] sm:$0xff] %vm47, %v1165
    %1181 = vst.msk [vmem:[#allocation2 + $0x28] sm:$0xff] %vm47, %v1168
    %1182 = vst.msk [vmem:[#allocation2 + $0x30] sm:$0xff] %vm47, %v1171
    %1183 = vst.msk [vmem:[#allocation2 + $0x38] sm:$0xff] %vm47, %v1174
    // Predicated region
    $region38: #{tpu_custom_call.1} parent=1 // pred_check
      _
    $region39: #{tpu_custom_call.1} parent=1 // pred_check_branch
      %1185 = sbr.rel (0) target = $region41
    $region40: #{tpu_custom_call.1} parent=1 // pred_region
      %1187 = vsyncadd [#allocation3], 0
      %s1188 = sshll.u32 [#allocation2], 4
      %s1189 = int_to_ptr.vmem [resolvable:$true] %s1188
      %s1190 = sshll.u32 %s9, 4
      %s1191 = int_to_ptr.hbm [resolvable:$true] %s1190
      %1196 = dma.vmem_to_hbm [thread:$0]  %s1189, 1024, %s1191, [#allocation3], 128, 128, 8
    $region41: #{tpu_custom_call.1} parent=1 // pred_fallthru
      _
    // Predicated region
    $region42: #{tpu_custom_call.1} parent=1 // pred_check
      _
    $region43: #{tpu_custom_call.1} parent=1 // pred_check_branch
      %1198 = sbr.rel (0) target = $region45
    $region44: #{tpu_custom_call.1} parent=1 // pred_region
      %1200 = dma.done [#allocation3], 1024
    $region45: #{tpu_custom_call.1} parent=1 // pred_fallthru
      _
    %1201 = vsyncpa [#allocation3], 1

</llo_original>
